<compile_context>
chip_gen: v5e
topology: v5e:2x2
jax: 0.10.0
libtpu: 0.0.40
codegen_flags: <defaults>
</compile_context>

<pallas_src>
import numpy as np
import jax
import jax.numpy as jnp
from jax.experimental import pallas as pl
from jax.experimental.pallas import tpu as pltpu

LOG10 = float(np.log(10.0))
EPS = 1e-10


def _round_up(n, m):
    return ((n + m - 1) // m) * m


# ---------------------------------------------------------------------------
# Stage 1: pinv reconstruction + layers 1/2 (runs once, everything resident).
# ---------------------------------------------------------------------------
def _make_stage1_kernel(B, D, D_pad):
    def kernel(x_ref, m_ref, p_ref, w1_ref, b1_ref, w2_ref, b2_ref,
               yfc_ref, h2_ref):
        # pinv reconstruction (interpolate=True, input_is_db=True)
        x_db = x_ref[...].astype(jnp.float32)                      # (B, T_in, F_in)
        power = jnp.exp(x_db * (LOG10 / 10.0))                     # dB -> power
        mel_pow = jnp.einsum('btf,fm->btm', power, p_ref[...],
                             preferred_element_type=jnp.float32)   # (B, T_in, MEL)
        mel_pow = jnp.einsum('ot,btm->bom', m_ref[...], mel_pow,
                             preferred_element_type=jnp.float32)   # (B, T_out, MEL)
        y_db = (10.0 / LOG10) * jnp.log(jnp.maximum(mel_pow, EPS))
        y_fc = y_db.reshape(B, D)                                  # (B, D)
        if D_pad > D:  # static zero-pad to the lane-dense / tileable width
            y_fc = jnp.concatenate(
                [y_fc, jnp.zeros((B, D_pad - D), jnp.float32)], axis=1)
        yfc_ref[...] = y_fc

        # layers 1 & 2 (small weights, bf16 x bf16 -> f32 accumulation)
        h1 = jnp.maximum(
            jnp.dot(y_fc.astype(jnp.bfloat16), w1_ref[...],
                    preferred_element_type=jnp.float32) + b1_ref[...], 0.0)
        h2 = jnp.maximum(
            jnp.dot(h1.astype(jnp.bfloat16), w2_ref[...],
                    preferred_element_type=jnp.float32) + b2_ref[...], 0.0)
        h2_ref[...] = h2.astype(jnp.bfloat16)
    return kernel


# ---------------------------------------------------------------------------
# Stage 2: stream tile-major W3 from HBM, one contiguous tile per grid step.
# No carried state -> grid axis is "parallel" (2 TCs on v7x).
# ---------------------------------------------------------------------------
def _stage2_kernel(yfc_ref, h2_ref, w3_ref, b3_ref, o_ref):
    y_pred = jnp.dot(h2_ref[...], w3_ref[...],
                     preferred_element_type=jnp.float32) + b3_ref[...]
    o_ref[...] = yfc_ref[...] - y_pred          # residual=True


def mlppinv_forward(x, params):
    B, T_in, F_in = x.shape
    T_out, MEL = params['out_shape']
    D = T_out * MEL

    M, P = params['M'], params['P']
    W1, b1 = params['W1'], params['b1']
    W2, b2 = params['W2'], params['b2']
    W3t, b3t = params['W3t'], params['b3t']        # tile-major (n_tiles, hl2p, TN)

    D_pad, hl1p = W1.shape
    hl2p = W2.shape[1]
    n_tiles, _, TN = W3t.shape
    assert n_tiles * TN == D_pad

    def full_spec(*shape):
        return pl.BlockSpec(shape, lambda i, _n=len(shape): (0,) * _n)

    # ---------------- stage 1 (one-shot) ----------------
    s1_in_bytes = sum(int(a.size) * a.dtype.itemsize
                      for a in (x, M, P, W1, b1, W2, b2))
    s1_out_bytes = B * D_pad * 4 + B * hl2p * 2
    # 2x: BlockSpec double-buffers every input even with a constant index_map.
    s1_vmem = int(min(max(2 * (s1_in_bytes + s1_out_bytes) + (16 << 20),
                          16 << 20), 48 << 20))

    y_fc, h2 = pl.pallas_call(
        _make_stage1_kernel(B, D, D_pad),
        out_shape=(jax.ShapeDtypeStruct((B, D_pad), jnp.float32),
                   jax.ShapeDtypeStruct((B, hl2p), jnp.bfloat16)),
        grid_spec=pltpu.PrefetchScalarGridSpec(
            num_scalar_prefetch=0,
            grid=(1,),
            in_specs=[full_spec(B, T_in, F_in),      # x
                      full_spec(T_out, T_in),        # time-interp matrix
                      full_spec(F_in, MEL),          # pinv filterbank
                      full_spec(D_pad, hl1p),        # W1 (bf16)
                      full_spec(1, hl1p),            # b1
                      full_spec(hl1p, hl2p),         # W2 (bf16)
                      full_spec(1, hl2p)],           # b2
            out_specs=(full_spec(B, D_pad), full_spec(B, hl2p))),
        compiler_params=pltpu.CompilerParams(
            dimension_semantics=("arbitrary",),
            vmem_limit_bytes=s1_vmem),
    )(x, M, P, W1, b1, W2, b2)

    # ---------------- stage 2 (W3 streamer) ----------------
    flops = int(2 * B * hl2p * D_pad)
    bytes_accessed = int(W3t.size * W3t.dtype.itemsize
                         + b3t.size * b3t.dtype.itemsize
                         + 2 * B * D_pad * 4 + B * hl2p * 2)
    per_step = hl2p * TN * 2 + TN * 4 + 2 * B * TN * 4   # W3 tile + b3 + yfc + out
    resident = B * hl2p * 2                              # h2
    s2_vmem = int(min(max(2 * (per_step + resident) + (8 << 20),
                          16 << 20), 48 << 20))

    # TODO(synk): if a trace shows exposed DMA gaps between tiles, bump the W3
    # BlockSpec to pipeline_mode=pl.Buffered(3).
    out2d = pl.pallas_call(
        _stage2_kernel,
        out_shape=jax.ShapeDtypeStruct((B, D_pad), jnp.float32),
        grid_spec=pltpu.PrefetchScalarGridSpec(
            num_scalar_prefetch=0,
            grid=(n_tiles,),
            in_specs=[
                pl.BlockSpec((B, TN), lambda j: (0, j)),          # y_fc tile
                pl.BlockSpec((B, hl2p), lambda j: (0, 0)),        # h2 (resident)
                # tile-major W3: one fully contiguous HBM slab per grid step
                pl.BlockSpec((None, hl2p, TN), lambda j: (j, 0, 0)),
                pl.BlockSpec((None, 1, TN), lambda j: (j, 0, 0)),  # b3 tile
            ],
            out_specs=pl.BlockSpec((B, TN), lambda j: (0, j))),    # lane-dense slab
        compiler_params=pltpu.CompilerParams(
            dimension_semantics=("parallel",),   # no carry -> shard across TCs
            vmem_limit_bytes=s2_vmem),
        cost_estimate=pl.CostEstimate(flops=flops, transcendentals=0,
                                      bytes_accessed=bytes_accessed),
    )(y_fc, h2, W3t, b3t)

    # Reshape to (B, T_out, MEL) in the wrapper (keeps in-kernel stores lane-dense).
    return out2d[:, :D].reshape(B, T_out, MEL)


def mlppinv_ref(x, params):
    """Pure-JAX reference (same padded bf16 weights / f32 accumulation)."""
    T_out, MEL = params['out_shape']
    B = x.shape[0]
    D = T_out * MEL
    D_pad = params['W1'].shape[0]
    hl2p = params['W2'].shape[1]
    n_tiles, _, TN = params['W3t'].shape
    W3 = params['W3t'].transpose(1, 0, 2).reshape(hl2p, D_pad)
    b3 = params['b3t'].reshape(1, D_pad)

    power = jnp.exp(x.astype(jnp.float32) * (LOG10 / 10.0))
    mel_pow = jnp.einsum('btf,fm->btm', power, params['P'])
    mel_pow = jnp.einsum('ot,btm->bom', params['M'], mel_pow)
    y_db = (10.0 / LOG10) * jnp.log(jnp.maximum(mel_pow, EPS))
    y_fc = y_db.reshape(B, D)
    y_fc_p = jnp.pad(y_fc, ((0, 0), (0, D_pad - D))) if D_pad > D else y_fc

    h1 = jax.nn.relu(jnp.dot(y_fc_p.astype(jnp.bfloat16), params['W1'],
                             preferred_element_type=jnp.float32) + params['b1'])
    h2 = jax.nn.relu(jnp.dot(h1.astype(jnp.bfloat16), params['W2'],
                             preferred_element_type=jnp.float32) + params['b2'])
    y_pred = jnp.dot(h2.astype(jnp.bfloat16), W3,
                     preferred_element_type=jnp.float32) + b3
    return (y_fc - y_pred[:, :D]).reshape(B, T_out, MEL)


def init_params(key, input_shape, output_shape, hl_1, hl_2, tn=1664):
    # tn=1664 divides the real-model D_pad (101*64=6464 -> 6656) exactly:
    # 4 grid steps of ~10 MiB contiguous W3 tiles (2x-buffered ~20 MiB fits v7x).
    T_in, F_in = input_shape
    T_out, MEL = output_shape
    D = T_out * MEL
    D_pad = _round_up(D, tn)        # lane-dense / tileable output width
    n_tiles = D_pad // tn
    hl1p = _round_up(hl_1, 128)     # pad hidden sizes to multiples of 128
    hl2p = _round_up(hl_2, 128)
    keys = jax.random.split(key, 4)

    # Synthetic mel->third-octave filterbank; its pseudo-inverse reconstructs mel bands.
    A = jax.random.uniform(keys[0], (MEL, F_in), jnp.float32)
    P = jnp.linalg.pinv(A)                                    # (F_in, MEL)

    # Linear time-interpolation matrix T_in -> T_out.
    pos = np.linspace(0.0, T_in - 1.0, T_out)
    lo = np.minimum(np.floor(pos).astype(np.int64), max(T_in - 2, 0))
    frac = (pos - lo).astype(np.float32)
    M = np.zeros((T_out, T_in), np.float32)
    M[np.arange(T_out), lo] = 1.0 - frac
    if T_in > 1:
        M[np.arange(T_out), lo + 1] += frac
    M = jnp.asarray(M)

    def linear(k, fan_in, fan_out, fan_in_pad, fan_out_pad):
        kw, kb = jax.random.split(k)
        bound = 1.0 / np.sqrt(fan_in)
        W = jax.random.uniform(kw, (fan_in, fan_out), jnp.float32, -bound, bound)
        b = jax.random.uniform(kb, (1, fan_out), jnp.float32, -bound, bound)
        Wp = jnp.zeros((fan_in_pad, fan_out_pad), jnp.float32).at[:fan_in, :fan_out].set(W)
        bp = jnp.zeros((1, fan_out_pad), jnp.float32).at[:, :fan_out].set(b)
        # bf16 weight storage halves the HBM weight stream (f32 MXU accumulation).
        return Wp.astype(jnp.bfloat16), bp

    W1, b1 = linear(keys[1], D, hl_1, D_pad, hl1p)       # input_fc (interpolate=True)
    W2, b2 = linear(keys[2], hl_1, hl_2, hl1p, hl2p)     # hidden_fc
    W3, b3 = linear(keys[3], hl_2, D, hl2p, D_pad)       # output_fc

    # Pre-tile W3/b3 into tile-major layout so each stage-2 grid step is one
    # fully contiguous HBM read (instead of hl2p strided ~1 KiB chunks).
    W3t = W3.reshape(hl2p, n_tiles, tn).transpose(1, 0, 2)   # (n_tiles, hl2p, TN)
    b3t = b3.reshape(n_tiles, 1, tn)                         # (n_tiles, 1, TN)
    # TODO(synk): fp8 W3t on v7x / int8 W3t+h2 on v5e/v6e for another ~2x on the
    # dominant weight stream (needs numerical validation vs. torch baseline).

    return dict(P=P, M=M, W1=W1, b1=b1, W2=W2, b2=b2, W3t=W3t, b3t=b3t,
                out_shape=(T_out, MEL), tn=tn)


if __name__ == "__main__":
    # Small shapes consistent with the module: (T_in, F_in) third-octave input,
    # (T_out, MEL) mel output, two hidden layers.
    B = 2
    input_shape = (4, 16)     # (8, 29) in the real model
    output_shape = (8, 64)    # (101, 64) in the real model -> D = 512 here
    hl_1, hl_2 = 128, 256     # 300, 3000 in the real model

    key = jax.random.PRNGKey(0)
    k_x, k_p = jax.random.split(key)
    # tn=256 at toy size so the grid has >1 step and exercises the tile-major
    # streamed-W3 path (production default tn=1664).
    params = init_params(k_p, input_shape, output_shape, hl_1, hl_2, tn=256)
    # Third-octave spectrogram in dB, roughly [-30, 0] dB.
    x = jax.random.uniform(k_x, (B,) + input_shape, jnp.float32, -30.0, 0.0)

    out = jax.block_until_ready(mlppinv_forward(x, params))
    ref = jax.block_until_ready(mlppinv_ref(x, params))
    np.testing.assert_allclose(np.asarray(out), np.asarray(ref), rtol=2e-2, atol=2e-2)
    assert out.shape == (B,) + output_shape

    print("KERNEL_OK")
</pallas_src>

<mosaic_0001>
module attributes {stable_mosaic.version = 11 : i64} {
  func.func @kernel(%arg0: i32, %arg1: memref<2x4x16xf32, #tpu.memory_space<vmem>>, %arg2: memref<8x4xf32, #tpu.memory_space<vmem>>, %arg3: memref<16x64xf32, #tpu.memory_space<vmem>>, %arg4: memref<512x128xbf16, #tpu.memory_space<vmem>>, %arg5: memref<1x128xf32, #tpu.memory_space<vmem>>, %arg6: memref<128x256xbf16, #tpu.memory_space<vmem>>, %arg7: memref<1x256xf32, #tpu.memory_space<vmem>>, %arg8: memref<2x512xf32, #tpu.memory_space<vmem>>, %arg9: memref<2x256xbf16, #tpu.memory_space<vmem>>) attributes {dimension_semantics = [#tpu.dimension_semantics<arbitrary>], iteration_bounds = array<i64: 1>, scalar_prefetch = 0 : i64, scratch_operands = 0 : i64, tpu.core_type = #tpu.core_type<tc>, window_params = [{pipeline_mode = #tpu.pipeline_mode<synchronous>, transform_indices = @transform_0, window_bounds = array<i64: 2, 4, 16>}, {pipeline_mode = #tpu.pipeline_mode<synchronous>, transform_indices = @transform_1, window_bounds = array<i64: 8, 4>}, {pipeline_mode = #tpu.pipeline_mode<synchronous>, transform_indices = @transform_2, window_bounds = array<i64: 16, 64>}, {pipeline_mode = #tpu.pipeline_mode<synchronous>, transform_indices = @transform_3, window_bounds = array<i64: 512, 128>}, {pipeline_mode = #tpu.pipeline_mode<synchronous>, transform_indices = @transform_4, window_bounds = array<i64: 1, 128>}, {pipeline_mode = #tpu.pipeline_mode<synchronous>, transform_indices = @transform_5, window_bounds = array<i64: 128, 256>}, {pipeline_mode = #tpu.pipeline_mode<synchronous>, transform_indices = @transform_6, window_bounds = array<i64: 1, 256>}, {pipeline_mode = #tpu.pipeline_mode<synchronous>, transform_indices = @transform_7, window_bounds = array<i64: 2, 512>}, {pipeline_mode = #tpu.pipeline_mode<synchronous>, transform_indices = @transform_8, window_bounds = array<i64: 2, 256>}]} {
    %c0 = arith.constant 0 : index
    %c0_0 = arith.constant 0 : index
    %c0_1 = arith.constant 0 : index
    %0 = vector.load %arg1[%c0, %c0_0, %c0_1] : memref<2x4x16xf32, #tpu.memory_space<vmem>>, vector<2x4x16xf32>
    %cst = arith.constant 0.23025851 : f32
    %1 = vector.broadcast %cst : f32 to vector<2x4x16xf32>
    %2 = arith.mulf %0, %1 : vector<2x4x16xf32>
    %3 = math.exp %2 : vector<2x4x16xf32>
    %c0_2 = arith.constant 0 : index
    %c0_3 = arith.constant 0 : index
    %4 = vector.load %arg3[%c0_2, %c0_3] : memref<16x64xf32, #tpu.memory_space<vmem>>, vector<16x64xf32>
    "tpu.trace_start"() <{level = 10 : i32, message = "btf,fm->btm"}> : () -> ()
    %cst_4 = arith.constant dense<0.000000e+00> : vector<2x4x64xf32>
    %5 = tpu.matmul %3, %4, %cst_4 {dimension_numbers = #tpu.dot_dimension_numbers<[2], [0], [0, 1], [1], [0, 0, 0, 1, 1, 1], [], []>} : vector<2x4x16xf32>, vector<16x64xf32>, vector<2x4x64xf32> -> vector<2x4x64xf32>
    "tpu.trace_stop"() : () -> ()
    %c0_5 = arith.constant 0 : index
    %c0_6 = arith.constant 0 : index
    %6 = vector.load %arg2[%c0_5, %c0_6] : memref<8x4xf32, #tpu.memory_space<vmem>>, vector<8x4xf32>
    "tpu.trace_start"() <{level = 10 : i32, message = "ot,btm->bom"}> : () -> ()
    %cst_7 = arith.constant dense<0.000000e+00> : vector<2x64x8xf32>
    %7 = tpu.matmul %5, %6, %cst_7 {dimension_numbers = #tpu.dot_dimension_numbers<[1], [1], [0, 2], [0], [0, 0, 0, 2, 1, 0], [], []>} : vector<2x4x64xf32>, vector<8x4xf32>, vector<2x64x8xf32> -> vector<2x64x8xf32>
    %8 = tpu.transpose %7, [0, 2, 1] : vector<2x64x8xf32> -> vector<2x8x64xf32>
    "tpu.trace_stop"() : () -> ()
    %cst_8 = arith.constant 1.000000e-10 : f32
    %9 = vector.broadcast %cst_8 : f32 to vector<2x8x64xf32>
    %10 = arith.maximumf %8, %9 : vector<2x8x64xf32>
    %11 = math.log %10 : vector<2x8x64xf32>
    %cst_9 = arith.constant 4.34294462 : f32
    %12 = vector.broadcast %cst_9 : f32 to vector<2x8x64xf32>
    %13 = arith.mulf %12, %11 : vector<2x8x64xf32>
    %14 = vector.shape_cast %13 : vector<2x8x64xf32> to vector<2x512xf32>
    %c0_10 = arith.constant 0 : index
    %c0_11 = arith.constant 0 : index
    %15 = vector.load %arg8[%c0_10, %c0_11] : memref<2x512xf32, #tpu.memory_space<vmem>>, vector<2x512xf32>
    tpu.vector_store %arg8[%c0_10, %c0_11], %14 {strides = array<i32>} : memref<2x512xf32, #tpu.memory_space<vmem>>, vector<2x512xf32>,
    %16 = arith.truncf %14 : vector<2x512xf32> to vector<2x512xbf16>
    %c0_12 = arith.constant 0 : index
    %c0_13 = arith.constant 0 : index
    %17 = vector.load %arg4[%c0_12, %c0_13] : memref<512x128xbf16, #tpu.memory_space<vmem>>, vector<512x128xbf16>
    %cst_14 = arith.constant dense<0.000000e+00> : vector<2x128xf32>
    %18 = tpu.matmul %16, %17, %cst_14 {dimension_numbers = #tpu.dot_dimension_numbers<[1], [0], [0], [1], [0, 0, 1, 1], [], []>} : vector<2x512xbf16>, vector<512x128xbf16>, vector<2x128xf32> -> vector<2x128xf32>
    %c0_15 = arith.constant 0 : index
    %c0_16 = arith.constant 0 : index
    %19 = vector.load %arg5[%c0_15, %c0_16] : memref<1x128xf32, #tpu.memory_space<vmem>>, vector<1x128xf32>
    %20 = vector.broadcast %19 : vector<1x128xf32> to vector<2x128xf32>
    %21 = arith.addf %18, %20 : vector<2x128xf32>
    %cst_17 = arith.constant 0.000000e+00 : f32
    %22 = vector.broadcast %cst_17 : f32 to vector<2x128xf32>
    %23 = arith.maximumf %21, %22 : vector<2x128xf32>
    %24 = arith.truncf %23 : vector<2x128xf32> to vector<2x128xbf16>
    %c0_18 = arith.constant 0 : index
    %c0_19 = arith.constant 0 : index
    %25 = vector.load %arg6[%c0_18, %c0_19] : memref<128x256xbf16, #tpu.memory_space<vmem>>, vector<128x256xbf16>
    %cst_20 = arith.constant dense<0.000000e+00> : vector<2x256xf32>
    %26 = tpu.matmul %24, %25, %cst_20 {dimension_numbers = #tpu.dot_dimension_numbers<[1], [0], [0], [1], [0, 0, 1, 1], [], []>} : vector<2x128xbf16>, vector<128x256xbf16>, vector<2x256xf32> -> vector<2x256xf32>
    %c0_21 = arith.constant 0 : index
    %c0_22 = arith.constant 0 : index
    %27 = vector.load %arg7[%c0_21, %c0_22] : memref<1x256xf32, #tpu.memory_space<vmem>>, vector<1x256xf32>
    %28 = vector.broadcast %27 : vector<1x256xf32> to vector<2x256xf32>
    %29 = arith.addf %26, %28 : vector<2x256xf32>
    %cst_23 = arith.constant 0.000000e+00 : f32
    %30 = vector.broadcast %cst_23 : f32 to vector<2x256xf32>
    %31 = arith.maximumf %29, %30 : vector<2x256xf32>
    %32 = arith.truncf %31 : vector<2x256xf32> to vector<2x256xbf16>
    %c0_24 = arith.constant 0 : index
    %c0_25 = arith.constant 0 : index
    %33 = vector.load %arg9[%c0_24, %c0_25] : memref<2x256xbf16, #tpu.memory_space<vmem>>, vector<2x256xbf16>
    tpu.vector_store %arg9[%c0_24, %c0_25], %32 {strides = array<i32>} : memref<2x256xbf16, #tpu.memory_space<vmem>>, vector<2x256xbf16>,
    return
  }
  func.func @transform_0(%arg0: i32) -> (i32, i32, i32) {
    %c0_i32 = arith.constant 0 : i32
    %c0_i32_0 = arith.constant 0 : i32
    %c0_i32_1 = arith.constant 0 : i32
    %c0_i32_2 = arith.constant 0 : i32
    return %c0_i32, %c0_i32_0, %c0_i32_1 : i32, i32, i32
  }
  func.func @transform_1(%arg0: i32) -> (i32, i32) {
    %c0_i32 = arith.constant 0 : i32
    %c0_i32_0 = arith.constant 0 : i32
    %c0_i32_1 = arith.constant 0 : i32
    return %c0_i32, %c0_i32_0 : i32, i32
  }
  func.func @transform_2(%arg0: i32) -> (i32, i32) {
    %c0_i32 = arith.constant 0 : i32
    %c0_i32_0 = arith.constant 0 : i32
    %c0_i32_1 = arith.constant 0 : i32
    return %c0_i32, %c0_i32_0 : i32, i32
  }
  func.func @transform_3(%arg0: i32) -> (i32, i32) {
    %c0_i32 = arith.constant 0 : i32
    %c0_i32_0 = arith.constant 0 : i32
    %c0_i32_1 = arith.constant 0 : i32
    return %c0_i32, %c0_i32_0 : i32, i32
  }
  func.func @transform_4(%arg0: i32) -> (i32, i32) {
    %c0_i32 = arith.constant 0 : i32
    %c0_i32_0 = arith.constant 0 : i32
    %c0_i32_1 = arith.constant 0 : i32
    return %c0_i32, %c0_i32_0 : i32, i32
  }
  func.func @transform_5(%arg0: i32) -> (i32, i32) {
    %c0_i32 = arith.constant 0 : i32
    %c0_i32_0 = arith.constant 0 : i32
    %c0_i32_1 = arith.constant 0 : i32
    return %c0_i32, %c0_i32_0 : i32, i32
  }
  func.func @transform_6(%arg0: i32) -> (i32, i32) {
    %c0_i32 = arith.constant 0 : i32
    %c0_i32_0 = arith.constant 0 : i32
    %c0_i32_1 = arith.constant 0 : i32
    return %c0_i32, %c0_i32_0 : i32, i32
  }
  func.func @transform_7(%arg0: i32) -> (i32, i32) {
    %c0_i32 = arith.constant 0 : i32
    %c0_i32_0 = arith.constant 0 : i32
    %c0_i32_1 = arith.constant 0 : i32
    return %c0_i32, %c0_i32_0 : i32, i32
  }
  func.func @transform_8(%arg0: i32) -> (i32, i32) {
    %c0_i32 = arith.constant 0 : i32
    %c0_i32_0 = arith.constant 0 : i32
    %c0_i32_1 = arith.constant 0 : i32
    return %c0_i32, %c0_i32_0 : i32, i32
  }
}

</mosaic_0001>

<llo_original>
// kernel: tpu_custom_call.1
$region0: #{tpu_custom_call.1}
  #allocation0 [shape = 'u32[]', space=smem, size = 0x4, offset = 0x4, fixed_abs, tag = 'smem constant byte address 0x4 - core index']
  #allocation1 [shape = 'u32[72,128]{1,0:T(1,128)}', space=vmem, size = 0x9000, scoped, tag = 'internal scratch']
  %s0 = inlined_call_operand.vmem [shape: f32[2,4,16], index: 0, kind: input, shape index: {}]
  %s1 = inlined_call_operand.vmem [shape: f32[8,4], index: 1, kind: input, shape index: {}]
  %s2 = inlined_call_operand.hbm [shape: f32[16,64], index: 2, kind: input, shape index: {}]
  %s3 = inlined_call_operand.hbm [shape: bf16[512,128], index: 3, kind: input, shape index: {}]
  %s4 = inlined_call_operand.vmem [shape: f32[1,128], index: 4, kind: input, shape index: {}]
  %s5 = inlined_call_operand.hbm [shape: bf16[128,256], index: 5, kind: input, shape index: {}]
  %s6 = inlined_call_operand.vmem [shape: f32[1,256], index: 6, kind: input, shape index: {}]
  %s7 = inlined_call_operand.hbm [shape: f32[2,512], index: 7, kind: output, shape index: {0}]
  %s8 = inlined_call_operand.hbm [shape: bf16[2,256], index: 8, kind: output, shape index: {1}]
  %9 = xla_tuple %s7, %s8
  %s10 = sld [smem:[#allocation0]]
  $region58: #{tpu_custom_call.1} parent=0
    _
  %s12 = ssub.s32 1, %s10
  %s13 = scalar_select 0, %s12, %s10
  $region1: #{tpu_custom_call.1} parent=0
    #allocation2 [shape = 'u8[8192]{0}', space=vmem, size = 0x2000, scoped, tag = 'input window, operand 2, single buffered']
    #allocation3 [shape = 's32[1]{0}', space=sflag, size = 0x4, scoped, tag = 'scoped memory for tpu_custom_call.1']
    #allocation4 [shape = 's32[1]{0}', space=sflag, size = 0x4, scoped, tag = 'scoped memory for tpu_custom_call.1']
    #allocation5 [shape = 'u8[131072]{0}', space=vmem, size = 0x20000, scoped, tag = 'input window, operand 3, single buffered']
    #allocation6 [shape = 's32[1]{0}', space=sflag, size = 0x4, scoped, tag = 'scoped memory for tpu_custom_call.1']
    #allocation7 [shape = 'u8[65536]{0}', space=vmem, size = 0x10000, scoped, tag = 'input window, operand 5, single buffered']
    #allocation8 [shape = 'u8[4096]{0}', space=vmem, size = 0x1000, scoped, tag = 'output window, operand 0, single buffered']
    #allocation9 [shape = 'u8[1024]{0}', space=vmem, size = 0x400, scoped, tag = 'output window, operand 1, single buffered']
    #allocation10 [shape = 's32[1]{0}', space=sflag, size = 0x4, scoped, tag = 'scoped memory for tpu_custom_call.1']
    %14 = vsyncpa [#allocation3], 0
    %15 = vsyncpa [#allocation6], 0
    %16 = vsyncpa [#allocation4], 0
    %17 = vsyncpa [#allocation10], 0
    // Predicated region
    $region2: #{tpu_custom_call.1} parent=1 // pred_check
      _
    $region3: #{tpu_custom_call.1} parent=1 // pred_check_branch
      %19 = sbr.rel (0) target = $region5
    $region4: #{tpu_custom_call.1} parent=1 // pred_region
      _
    $region5: #{tpu_custom_call.1} parent=1 // pred_fallthru
      _
    // Predicated region
    $region6: #{tpu_custom_call.1} parent=1 // pred_check
      _
    $region7: #{tpu_custom_call.1} parent=1 // pred_check_branch
      %21 = sbr.rel (0) target = $region9
    $region8: #{tpu_custom_call.1} parent=1 // pred_region
      _
    $region9: #{tpu_custom_call.1} parent=1 // pred_fallthru
      _
    // Predicated region
    $region10: #{tpu_custom_call.1} parent=1 // pred_check
      _
    $region11: #{tpu_custom_call.1} parent=1 // pred_check_branch
      %23 = sbr.rel (0) target = $region13
    $region12: #{tpu_custom_call.1} parent=1 // pred_region
      %25 = vsyncadd [#allocation3], 0
      %s26 = sshll.u32 %s2, 4
      %s27 = int_to_ptr.hbm [resolvable:$true] %s26
      %s28 = sshll.u32 [#allocation2], 4
      %s29 = int_to_ptr.vmem [resolvable:$true] %s28
      %34 = dma.hbm_to_vmem [thread:$0]  %s27, 256, %s29, [#allocation3], 128, 128, 8
    $region13: #{tpu_custom_call.1} parent=1 // pred_fallthru
      _
    // Predicated region
    $region14: #{tpu_custom_call.1} parent=1 // pred_check
      _
    $region15: #{tpu_custom_call.1} parent=1 // pred_check_branch
      %36 = sbr.rel (0) target = $region17
    $region16: #{tpu_custom_call.1} parent=1 // pred_region
      %38 = vsyncadd [#allocation6], 0
      %s39 = sshll.u32 %s3, 4
      %s40 = int_to_ptr.hbm [resolvable:$true] %s39
      %s41 = sshll.u32 [#allocation5], 4
      %s42 = int_to_ptr.vmem [resolvable:$true] %s41
      %47 = dma.hbm_to_vmem [thread:$0]  %s40, 4096, %s42, [#allocation6], 64, 64, 4
    $region17: #{tpu_custom_call.1} parent=1 // pred_fallthru
      _
    // Predicated region
    $region18: #{tpu_custom_call.1} parent=1 // pred_check
      _
    $region19: #{tpu_custom_call.1} parent=1 // pred_check_branch
      %49 = sbr.rel (0) target = $region21
    $region20: #{tpu_custom_call.1} parent=1 // pred_region
      _
    $region21: #{tpu_custom_call.1} parent=1 // pred_fallthru
      _
    // Predicated region
    $region22: #{tpu_custom_call.1} parent=1 // pred_check
      _
    $region23: #{tpu_custom_call.1} parent=1 // pred_check_branch
      %51 = sbr.rel (0) target = $region25
    $region24: #{tpu_custom_call.1} parent=1 // pred_region
      %53 = vsyncadd [#allocation6], 0
      %s54 = sshll.u32 %s5, 4
      %s55 = int_to_ptr.hbm [resolvable:$true] %s54
      %s56 = sshll.u32 [#allocation7], 4
      %s57 = int_to_ptr.vmem [resolvable:$true] %s56
      %62 = dma.hbm_to_vmem [thread:$0]  %s55, 2048, %s57, [#allocation6], 128, 128, 8
    $region25: #{tpu_custom_call.1} parent=1 // pred_fallthru
      _
    // Predicated region
    $region26: #{tpu_custom_call.1} parent=1 // pred_check
      _
    $region27: #{tpu_custom_call.1} parent=1 // pred_check_branch
      %64 = sbr.rel (0) target = $region29
    $region28: #{tpu_custom_call.1} parent=1 // pred_region
      _
    $region29: #{tpu_custom_call.1} parent=1 // pred_fallthru
      _
    // Predicated region
    $region30: #{tpu_custom_call.1} parent=1 // pred_check
      _
    $region31: #{tpu_custom_call.1} parent=1 // pred_check_branch
      %66 = sbr.rel (0) target = $region33
    $region32: #{tpu_custom_call.1} parent=1 // pred_region
      %68 = dma.done [#allocation3], 256
    $region33: #{tpu_custom_call.1} parent=1 // pred_fallthru
      _
    // Predicated region
    $region34: #{tpu_custom_call.1} parent=1 // pred_check
      _
    $region35: #{tpu_custom_call.1} parent=1 // pred_check_branch
      %70 = sbr.rel (0) target = $region37
    $region36: #{tpu_custom_call.1} parent=1 // pred_region
      %72 = dma.done [#allocation6], 4096
    $region37: #{tpu_custom_call.1} parent=1 // pred_fallthru
      _
    // Predicated region
    $region38: #{tpu_custom_call.1} parent=1 // pred_check
      _
    $region39: #{tpu_custom_call.1} parent=1 // pred_check_branch
      %74 = sbr.rel (0) target = $region41
    $region40: #{tpu_custom_call.1} parent=1 // pred_region
      %76 = dma.done [#allocation6], 2048
    $region41: #{tpu_custom_call.1} parent=1 // pred_fallthru
      _
    %v77 = vld [vmem:[%s0] sm:$0xf]
    %v78 = vld [vmem:[%s0 + $0x4] sm:$0xf]
    %v79 = vmul.f32 %v77, 0.23025851
    %v80 = vmul.f32 %v78, 0.23025851
    %v81 = vmul.f32 %v79, 1.442695
    %v82 = vpow.pop %v81
    %v83 = vmul.f32 %v80, 1.442695
    %v84 = vpow.pop %v83
    %v85 = vld [vmem:[#allocation2] sm:$0xff]
    %v86 = vld [vmem:[#allocation2 + $0x8] sm:$0xff]
    %89 = vst [vmem:[#allocation1] ss:$2 sm:$0xff] %v82
    %s90 = scalar_lea.vmem [#allocation1], 1
    %91 = vst [vmem:[%s90] ss:$2 sm:$0xff] %v84
    %v92 = vld.sshfl [vmem:[#allocation1] sm:$0xff pattern:$0x75316420]
    %vm93 = vcmask 130048
    %v94 = vsel %vm93, %v92, 0
    %96 = vmatpush.msra.mxu0 0.0
    %97 = vmatpush.msra.mxu0 0.0
    %98 = vmatpush.msra.mxu0 0.0
    %99 = vmatpush.msra.mxu0 0.0
    %100 = vmatpush.msra.mxu0 0.0
    %101 = vmatpush.msra.mxu0 0.0
    %102 = vmatpush.msra.mxu0 0.0
    %103 = vmatpush.msra.mxu0 0.0
    %104 = vmatpush.msra.mxu0 0.0
    %105 = vmatpush.msra.mxu0 0.0
    %106 = vmatpush.msra.mxu0 0.0
    %107 = vmatpush.msra.mxu0 0.0
    %108 = vmatpush.msra.mxu0 0.0
    %109 = vmatpush.msra.mxu0 0.0
    %110 = vmatpush.msra.mxu0 %v86
    %111 = vmatpush.msra.mxu0 %v85
    %112 = vmatmul.f32.gmra.mxu0 %v94
    %v113 = vpop.f32.mrf.mxu0
    %v114 = vadd.f32 0.0, %v113
    %115 = vdwg.mxu0
    %v117 = vrot.slane %v114, 4
    %v119 = vld [vmem:[%s1] sm:$0xff]
    %120 = vxpose.xlu0.b32.start [1/16] %v114, 128
    %121 = vxpose.xlu0.b32.cont [2/16] 0.0, 128
    %122 = vxpose.xlu0.b32.cont [3/16] 0.0, 128
    %123 = vxpose.xlu0.b32.cont [4/16] 0.0, 128
    %124 = vxpose.xlu0.b32.cont [5/16] 0.0, 128
    %125 = vxpose.xlu0.b32.cont [6/16] 0.0, 128
    %126 = vxpose.xlu0.b32.cont [7/16] 0.0, 128
    %127 = vxpose.xlu0.b32.cont [8/16] 0.0, 128
    %128 = vxpose.xlu0.b32.cont [9/16] 0.0, 128
    %129 = vxpose.xlu0.b32.cont [10/16] 0.0, 128
    %130 = vxpose.xlu0.b32.cont [11/16] 0.0, 128
    %131 = vxpose.xlu0.b32.cont [12/16] 0.0, 128
    %132 = vxpose.xlu0.b32.cont [13/16] 0.0, 128
    %133 = vxpose.xlu0.b32.cont [14/16] 0.0, 128
    %134 = vxpose.xlu0.b32.cont [15/16] 0.0, 128
    %135 = vxpose.xlu0.b32.end [16/16] 0.0, 128
    %v136 = vpop.trf.xlu0
    %v137 = vpop.trf.xlu0
    %v138 = vpop.trf.xlu0
    %v139 = vpop.trf.xlu0
    %v140 = vpop.trf.xlu0
    %v141 = vpop.trf.xlu0
    %v142 = vpop.trf.xlu0
    %v143 = vpop.trf.xlu0
    %v144 = vpop.trf.xlu0
    %v145 = vpop.trf.xlu0
    %v146 = vpop.trf.xlu0
    %v147 = vpop.trf.xlu0
    %v148 = vpop.trf.xlu0
    %v149 = vpop.trf.xlu0
    %v150 = vpop.trf.xlu0
    %v151 = vpop.trf.xlu0
    %152 = vxpose.xlu0.b32.start [1/16] %v117, 128
    %153 = vxpose.xlu0.b32.cont [2/16] 0.0, 128
    %154 = vxpose.xlu0.b32.cont [3/16] 0.0, 128
    %155 = vxpose.xlu0.b32.cont [4/16] 0.0, 128
    %156 = vxpose.xlu0.b32.cont [5/16] 0.0, 128
    %157 = vxpose.xlu0.b32.cont [6/16] 0.0, 128
    %158 = vxpose.xlu0.b32.cont [7/16] 0.0, 128
    %159 = vxpose.xlu0.b32.cont [8/16] 0.0, 128
    %160 = vxpose.xlu0.b32.cont [9/16] 0.0, 128
    %161 = vxpose.xlu0.b32.cont [10/16] 0.0, 128
    %162 = vxpose.xlu0.b32.cont [11/16] 0.0, 128
    %163 = vxpose.xlu0.b32.cont [12/16] 0.0, 128
    %164 = vxpose.xlu0.b32.cont [13/16] 0.0, 128
    %165 = vxpose.xlu0.b32.cont [14/16] 0.0, 128
    %166 = vxpose.xlu0.b32.cont [15/16] 0.0, 128
    %167 = vxpose.xlu0.b32.end [16/16] 0.0, 128
    %v168 = vpop.trf.xlu0
    %v169 = vpop.trf.xlu0
    %v170 = vpop.trf.xlu0
    %v171 = vpop.trf.xlu0
    %v172 = vpop.trf.xlu0
    %v173 = vpop.trf.xlu0
    %v174 = vpop.trf.xlu0
    %v175 = vpop.trf.xlu0
    %v176 = vpop.trf.xlu0
    %v177 = vpop.trf.xlu0
    %v178 = vpop.trf.xlu0
    %v179 = vpop.trf.xlu0
    %v180 = vpop.trf.xlu0
    %v181 = vpop.trf.xlu0
    %v182 = vpop.trf.xlu0
    %v183 = vpop.trf.xlu0
    %vm184 = vcmask 31744
    %v186 = vsel %vm184, %v136, 0
    %v189 = vsel %vm184, %v137, 0
    %v192 = vsel %vm184, %v138, 0
    %v195 = vsel %vm184, %v139, 0
    %v198 = vsel %vm184, %v140, 0
    %v201 = vsel %vm184, %v141, 0
    %v204 = vsel %vm184, %v142, 0
    %v207 = vsel %vm184, %v143, 0
    %v210 = vsel %vm184, %v168, 0
    %v213 = vsel %vm184, %v169, 0
    %v216 = vsel %vm184, %v170, 0
    %v219 = vsel %vm184, %v171, 0
    %v222 = vsel %vm184, %v172, 0
    %v225 = vsel %vm184, %v173, 0
    %v228 = vsel %vm184, %v174, 0
    %v231 = vsel %vm184, %v175, 0
    %v234 = vsel %vm184, %v119, 0
    %236 = vmatpush.xpose.msra.mxu0 0.0
    %237 = vmatpush.xpose.msra.mxu0 0.0
    %238 = vmatpush.xpose.msra.mxu0 0.0
    %239 = vmatpush.xpose.msra.mxu0 0.0
    %240 = vmatpush.xpose.msra.mxu0 0.0
    %241 = vmatpush.xpose.msra.mxu0 0.0
    %242 = vmatpush.xpose.msra.mxu0 0.0
    %243 = vmatpush.xpose.msra.mxu0 0.0
    %244 = vmatpush.xpose.msra.mxu0 0.0
    %245 = vmatpush.xpose.msra.mxu0 0.0
    %246 = vmatpush.xpose.msra.mxu0 0.0
    %247 = vmatpush.xpose.msra.mxu0 0.0
    %248 = vmatpush.xpose.msra.mxu0 0.0
    %249 = vmatpush.xpose.msra.mxu0 0.0
    %250 = vmatpush.xpose.msra.mxu0 0.0
    %251 = vmatpush.xpose.msra.mxu0 %v234
    %252 = vmatmul.f32.gmra.mxu0 %v186
    %v253 = vpop.f32.mrf.mxu0
    %v254 = vadd.f32 0.0, %v253
    %255 = vmatmul.f32.gmra.mxu0 %v189
    %v256 = vpop.f32.mrf.mxu0
    %v257 = vadd.f32 0.0, %v256
    %258 = vmatmul.f32.gmra.mxu0 %v192
    %v259 = vpop.f32.mrf.mxu0
    %v260 = vadd.f32 0.0, %v259
    %261 = vmatmul.f32.gmra.mxu0 %v195
    %v262 = vpop.f32.mrf.mxu0
    %v263 = vadd.f32 0.0, %v262
    %264 = vmatmul.f32.gmra.mxu0 %v198
    %v265 = vpop.f32.mrf.mxu0
    %v266 = vadd.f32 0.0, %v265
    %267 = vmatmul.f32.gmra.mxu0 %v201
    %v268 = vpop.f32.mrf.mxu0
    %v269 = vadd.f32 0.0, %v268
    %270 = vmatmul.f32.gmra.mxu0 %v204
    %v271 = vpop.f32.mrf.mxu0
    %v272 = vadd.f32 0.0, %v271
    %273 = vmatmul.f32.gmra.mxu0 %v207
    %v274 = vpop.f32.mrf.mxu0
    %v275 = vadd.f32 0.0, %v274
    %276 = vmatmul.f32.gmra.mxu0 %v210
    %v277 = vpop.f32.mrf.mxu0
    %v278 = vadd.f32 0.0, %v277
    %279 = vmatmul.f32.gmra.mxu0 %v213
    %v280 = vpop.f32.mrf.mxu0
    %v281 = vadd.f32 0.0, %v280
    %282 = vmatmul.f32.gmra.mxu0 %v216
    %v283 = vpop.f32.mrf.mxu0
    %v284 = vadd.f32 0.0, %v283
    %285 = vmatmul.f32.gmra.mxu0 %v219
    %v286 = vpop.f32.mrf.mxu0
    %v287 = vadd.f32 0.0, %v286
    %288 = vmatmul.f32.gmra.mxu0 %v222
    %v289 = vpop.f32.mrf.mxu0
    %v290 = vadd.f32 0.0, %v289
    %291 = vmatmul.f32.gmra.mxu0 %v225
    %v292 = vpop.f32.mrf.mxu0
    %v293 = vadd.f32 0.0, %v292
    %294 = vmatmul.f32.gmra.mxu0 %v228
    %v295 = vpop.f32.mrf.mxu0
    %v296 = vadd.f32 0.0, %v295
    %297 = vmatmul.f32.gmra.mxu0 %v231
    %v298 = vpop.f32.mrf.mxu0
    %v299 = vadd.f32 0.0, %v298
    %300 = vdwg.mxu0
    %301 = vxpose.xlu0.b32.start [1/16] %v254, 128
    %302 = vxpose.xlu0.b32.cont [2/16] %v257, 128
    %303 = vxpose.xlu0.b32.cont [3/16] %v260, 128
    %304 = vxpose.xlu0.b32.cont [4/16] %v263, 128
    %305 = vxpose.xlu0.b32.cont [5/16] %v266, 128
    %306 = vxpose.xlu0.b32.cont [6/16] %v269, 128
    %307 = vxpose.xlu0.b32.cont [7/16] %v272, 128
    %308 = vxpose.xlu0.b32.cont [8/16] %v275, 128
    %309 = vxpose.xlu0.b32.cont [9/16] 0.0, 128
    %310 = vxpose.xlu0.b32.cont [10/16] 0.0, 128
    %311 = vxpose.xlu0.b32.cont [11/16] 0.0, 128
    %312 = vxpose.xlu0.b32.cont [12/16] 0.0, 128
    %313 = vxpose.xlu0.b32.cont [13/16] 0.0, 128
    %314 = vxpose.xlu0.b32.cont [14/16] 0.0, 128
    %315 = vxpose.xlu0.b32.cont [15/16] 0.0, 128
    %316 = vxpose.xlu0.b32.end [16/16] 0.0, 128
    %v317 = vpop.trf.xlu0
    %v318 = vpop.trf.xlu0
    %v319 = vpop.trf.xlu0
    %v320 = vpop.trf.xlu0
    %v321 = vpop.trf.xlu0
    %v322 = vpop.trf.xlu0
    %v323 = vpop.trf.xlu0
    %v324 = vpop.trf.xlu0
    %v325 = vpop.trf.xlu0
    %v326 = vpop.trf.xlu0
    %v327 = vpop.trf.xlu0
    %v328 = vpop.trf.xlu0
    %v329 = vpop.trf.xlu0
    %v330 = vpop.trf.xlu0
    %v331 = vpop.trf.xlu0
    %v332 = vpop.trf.xlu0
    %333 = vxpose.xlu0.b32.start [1/16] %v278, 128
    %334 = vxpose.xlu0.b32.cont [2/16] %v281, 128
    %335 = vxpose.xlu0.b32.cont [3/16] %v284, 128
    %336 = vxpose.xlu0.b32.cont [4/16] %v287, 128
    %337 = vxpose.xlu0.b32.cont [5/16] %v290, 128
    %338 = vxpose.xlu0.b32.cont [6/16] %v293, 128
    %339 = vxpose.xlu0.b32.cont [7/16] %v296, 128
    %340 = vxpose.xlu0.b32.cont [8/16] %v299, 128
    %341 = vxpose.xlu0.b32.cont [9/16] 0.0, 128
    %342 = vxpose.xlu0.b32.cont [10/16] 0.0, 128
    %343 = vxpose.xlu0.b32.cont [11/16] 0.0, 128
    %344 = vxpose.xlu0.b32.cont [12/16] 0.0, 128
    %345 = vxpose.xlu0.b32.cont [13/16] 0.0, 128
    %346 = vxpose.xlu0.b32.cont [14/16] 0.0, 128
    %347 = vxpose.xlu0.b32.cont [15/16] 0.0, 128
    %348 = vxpose.xlu0.b32.end [16/16] 0.0, 128
    %v349 = vpop.trf.xlu0
    %v350 = vpop.trf.xlu0
    %v351 = vpop.trf.xlu0
    %v352 = vpop.trf.xlu0
    %v353 = vpop.trf.xlu0
    %v354 = vpop.trf.xlu0
    %v355 = vpop.trf.xlu0
    %v356 = vpop.trf.xlu0
    %v357 = vpop.trf.xlu0
    %v358 = vpop.trf.xlu0
    %v359 = vpop.trf.xlu0
    %v360 = vpop.trf.xlu0
    %v361 = vpop.trf.xlu0
    %v362 = vpop.trf.xlu0
    %v363 = vpop.trf.xlu0
    %v364 = vpop.trf.xlu0
    %v365 = vmax.f32 %v317, 1e-10
    %v366 = vmax.f32 %v349, 1e-10
    %v367 = vlog2.pop %v365
    %v368 = vmul.f32 %v367, 0.6931472
    %v369 = vlog2.pop %v366
    %v370 = vmul.f32 %v369, 0.6931472
    %v371 = vmul.f32 %v368, 4.3429446
    %v372 = vmul.f32 %v370, 4.3429446
    %v373 = vrot.slane %v371, 4
    %vm374 = vcmask 1047556
    %v375 = vsel %vm374, 0.0, %v373
    %v377 = vunpack.c.l.s4 1983009808
    %v378 = vunpack.c.0.s8 %v377
    %v379 = vperm.slane %v371, %v378
    %v381 = vunpack.c.l.s4 1983009808
    %v382 = vunpack.c.0.s8 %v381
    %v383 = vperm.slane %v375, %v382
    %v384 = vrot.slane %v372, 4
    %v385 = vsel %vm374, 0.0, %v384
    %v387 = vunpack.c.l.s4 1983009808
    %v388 = vunpack.c.0.s8 %v387
    %v389 = vperm.slane %v372, %v388
    %v391 = vunpack.c.l.s4 1983009808
    %v392 = vunpack.c.0.s8 %v391
    %v393 = vperm.slane %v385, %v392
    %v394 = vrot.slane %v389, 4
    %v395 = vsel %vm374, %v394, %v379
    %v396 = vrot.slane %v379, 4
    %v397 = vsel %vm374, %v389, %v396
    %v399 = vunpack.c.l.s4 1934713408
    %v400 = vunpack.c.0.s8 %v399
    %v401 = vperm.slane %v395, %v400
    %v403 = vunpack.c.l.s4 1934713408
    %v404 = vunpack.c.0.s8 %v403
    %v405 = vperm.slane %v397, %v404
    %v406 = vrot.slane %v393, 4
    %v407 = vsel %vm374, %v406, %v383
    %v408 = vrot.slane %v383, 4
    %v409 = vsel %vm374, %v393, %v408
    %v411 = vunpack.c.l.s4 1934713408
    %v412 = vunpack.c.0.s8 %v411
    %v413 = vperm.slane %v407, %v412
    %v415 = vunpack.c.l.s4 1934713408
    %v416 = vunpack.c.0.s8 %v415
    %v417 = vperm.slane %v409, %v416
    %v418 = vrot.slane %v401, 4
    %v419 = vsel %vm374, 0.0, %v418
    %v420 = vrot.slane %v405, 4
    %v421 = vsel %vm374, 0.0, %v420
    %v422 = vrot.slane %v413, 4
    %v423 = vsel %vm374, 0.0, %v422
    %v424 = vrot.slane %v417, 4
    %v425 = vsel %vm374, 0.0, %v424
    %427 = vrot.lane.b32.xlu0 %v419, 64
    %v428 = vpop.permute.xlu0 %427
    %431 = vrot.lane.b32.xlu0 %v421, 64
    %v432 = vpop.permute.xlu0 %431
    %435 = vrot.lane.b32.xlu0 %v423, 64
    %v436 = vpop.permute.xlu0 %435
    %439 = vrot.lane.b32.xlu0 %v425, 64
    %v440 = vpop.permute.xlu0 %439
    %vm442 = vcmask 523264
    %v443 = vsel %vm442, %v401, %v428
    %v444 = vsel %vm442, %v405, %v432
    %v445 = vsel %vm442, %v413, %v436
    %v446 = vsel %vm442, %v417, %v440
    %v451 = vrot.slane %v444, 6
    %v452 = vrot.slane %v445, 4
    %v453 = vrot.slane %v446, 2
    %vm454 = vcmask 1041408
    %v455 = vsel %vm454, %v443, %v451
    %vm456 = vcmask 1045508
    %v457 = vsel %vm456, %v452, %v453
    %vm458 = vcmask 1043456
    %v459 = vsel %vm458, %v455, %v457
    %461 = vst [vmem:[#allocation8] sm:$0xff] %v459
    %v462 = vpack.c.bf16 %v443, %v443
    %v463 = vpack.c.bf16 %v444, %v444
    %v464 = vpack.c.bf16 %v445, %v445
    %v465 = vpack.c.bf16 %v446, %v446
    %v466 = vld [vmem:[#allocation5] sm:$0xf]
    %v467 = vld [vmem:[#allocation5 + $0x4] sm:$0xf]
    %v468 = vld [vmem:[#allocation5 + $0x8] sm:$0xf]
    %v469 = vld [vmem:[#allocation5 + $0xc] sm:$0xf]
    %v470 = vld [vmem:[#allocation5 + $0x10] sm:$0xf]
    %v471 = vld [vmem:[#allocation5 + $0x14] sm:$0xf]
    %v472 = vld [vmem:[#allocation5 + $0x18] sm:$0xf]
    %v473 = vld [vmem:[#allocation5 + $0x1c] sm:$0xf]
    %v474 = vld [vmem:[#allocation5 + $0x20] sm:$0xf]
    %v475 = vld [vmem:[#allocation5 + $0x24] sm:$0xf]
    %v476 = vld [vmem:[#allocation5 + $0x28] sm:$0xf]
    %v477 = vld [vmem:[#allocation5 + $0x2c] sm:$0xf]
    %v478 = vld [vmem:[#allocation5 + $0x30] sm:$0xf]
    %v479 = vld [vmem:[#allocation5 + $0x34] sm:$0xf]
    %v480 = vld [vmem:[#allocation5 + $0x38] sm:$0xf]
    %v481 = vld [vmem:[#allocation5 + $0x3c] sm:$0xf]
    %v482 = vld [vmem:[#allocation5 + $0x40] sm:$0xf]
    %v483 = vld [vmem:[#allocation5 + $0x44] sm:$0xf]
    %v484 = vld [vmem:[#allocation5 + $0x48] sm:$0xf]
    %v485 = vld [vmem:[#allocation5 + $0x4c] sm:$0xf]
    %v486 = vld [vmem:[#allocation5 + $0x50] sm:$0xf]
    %v487 = vld [vmem:[#allocation5 + $0x54] sm:$0xf]
    %v488 = vld [vmem:[#allocation5 + $0x58] sm:$0xf]
    %v489 = vld [vmem:[#allocation5 + $0x5c] sm:$0xf]
    %v490 = vld [vmem:[#allocation5 + $0x60] sm:$0xf]
    %v491 = vld [vmem:[#allocation5 + $0x64] sm:$0xf]
    %v492 = vld [vmem:[#allocation5 + $0x68] sm:$0xf]
    %v493 = vld [vmem:[#allocation5 + $0x6c] sm:$0xf]
    %v494 = vld [vmem:[#allocation5 + $0x70] sm:$0xf]
    %v495 = vld [vmem:[#allocation5 + $0x74] sm:$0xf]
    %v496 = vld [vmem:[#allocation5 + $0x78] sm:$0xf]
    %v497 = vld [vmem:[#allocation5 + $0x7c] sm:$0xf]
    %v498 = vld [vmem:[#allocation5 + $0x80] sm:$0xf]
    %v499 = vld [vmem:[#allocation5 + $0x84] sm:$0xf]
    %v500 = vld [vmem:[#allocation5 + $0x88] sm:$0xf]
    %v501 = vld [vmem:[#allocation5 + $0x8c] sm:$0xf]
    %v502 = vld [vmem:[#allocation5 + $0x90] sm:$0xf]
    %v503 = vld [vmem:[#allocation5 + $0x94] sm:$0xf]
    %v504 = vld [vmem:[#allocation5 + $0x98] sm:$0xf]
    %v505 = vld [vmem:[#allocation5 + $0x9c] sm:$0xf]
    %v506 = vld [vmem:[#allocation5 + $0xa0] sm:$0xf]
    %v507 = vld [vmem:[#allocation5 + $0xa4] sm:$0xf]
    %v508 = vld [vmem:[#allocation5 + $0xa8] sm:$0xf]
    %v509 = vld [vmem:[#allocation5 + $0xac] sm:$0xf]
    %v510 = vld [vmem:[#allocation5 + $0xb0] sm:$0xf]
    %v511 = vld [vmem:[#allocation5 + $0xb4] sm:$0xf]
    %v512 = vld [vmem:[#allocation5 + $0xb8] sm:$0xf]
    %v513 = vld [vmem:[#allocation5 + $0xbc] sm:$0xf]
    %v514 = vld [vmem:[#allocation5 + $0xc0] sm:$0xf]
    %v515 = vld [vmem:[#allocation5 + $0xc4] sm:$0xf]
    %v516 = vld [vmem:[#allocation5 + $0xc8] sm:$0xf]
    %v517 = vld [vmem:[#allocation5 + $0xcc] sm:$0xf]
    %v518 = vld [vmem:[#allocation5 + $0xd0] sm:$0xf]
    %v519 = vld [vmem:[#allocation5 + $0xd4] sm:$0xf]
    %v520 = vld [vmem:[#allocation5 + $0xd8] sm:$0xf]
    %v521 = vld [vmem:[#allocation5 + $0xdc] sm:$0xf]
    %v522 = vld [vmem:[#allocation5 + $0xe0] sm:$0xf]
    %v523 = vld [vmem:[#allocation5 + $0xe4] sm:$0xf]
    %v524 = vld [vmem:[#allocation5 + $0xe8] sm:$0xf]
    %v525 = vld [vmem:[#allocation5 + $0xec] sm:$0xf]
    %v526 = vld [vmem:[#allocation5 + $0xf0] sm:$0xf]
    %v527 = vld [vmem:[#allocation5 + $0xf4] sm:$0xf]
    %v528 = vld [vmem:[#allocation5 + $0xf8] sm:$0xf]
    %v529 = vld [vmem:[#allocation5 + $0xfc] sm:$0xf]
    %v530 = vld [vmem:[%s4] sm:$0x1]
    %v532 = vperm.slane %v530, 0
    %v598 = vunpack.c.l.b16 %v466
    %v599 = vunpack.c.l.b16 %v467
    %v600 = vunpack.c.l.b16 %v468
    %v601 = vunpack.c.l.b16 %v469
    %v602 = vunpack.c.l.b16 %v470
    %v603 = vunpack.c.l.b16 %v471
    %v604 = vunpack.c.l.b16 %v472
    %v605 = vunpack.c.l.b16 %v473
    %v606 = vunpack.c.l.b16 %v474
    %v607 = vunpack.c.l.b16 %v475
    %v608 = vunpack.c.l.b16 %v476
    %v609 = vunpack.c.l.b16 %v477
    %v610 = vunpack.c.l.b16 %v478
    %v611 = vunpack.c.l.b16 %v479
    %v612 = vunpack.c.l.b16 %v480
    %v613 = vunpack.c.l.b16 %v481
    %v614 = vunpack.c.l.b16 %v482
    %v615 = vunpack.c.l.b16 %v483
    %v616 = vunpack.c.l.b16 %v484
    %v617 = vunpack.c.l.b16 %v485
    %v618 = vunpack.c.l.b16 %v486
    %v619 = vunpack.c.l.b16 %v487
    %v620 = vunpack.c.l.b16 %v488
    %v621 = vunpack.c.l.b16 %v489
    %v622 = vunpack.c.l.b16 %v490
    %v623 = vunpack.c.l.b16 %v491
    %v624 = vunpack.c.l.b16 %v492
    %v625 = vunpack.c.l.b16 %v493
    %v626 = vunpack.c.l.b16 %v494
    %v627 = vunpack.c.l.b16 %v495
    %v628 = vunpack.c.l.b16 %v496
    %v629 = vunpack.c.l.b16 %v497
    %v630 = vunpack.c.l.b16 %v498
    %v631 = vunpack.c.l.b16 %v499
    %v632 = vunpack.c.l.b16 %v500
    %v633 = vunpack.c.l.b16 %v501
    %v634 = vunpack.c.l.b16 %v502
    %v635 = vunpack.c.l.b16 %v503
    %v636 = vunpack.c.l.b16 %v504
    %v637 = vunpack.c.l.b16 %v505
    %v638 = vunpack.c.l.b16 %v506
    %v639 = vunpack.c.l.b16 %v507
    %v640 = vunpack.c.l.b16 %v508
    %v641 = vunpack.c.l.b16 %v509
    %v642 = vunpack.c.l.b16 %v510
    %v643 = vunpack.c.l.b16 %v511
    %v644 = vunpack.c.l.b16 %v512
    %v645 = vunpack.c.l.b16 %v513
    %v646 = vunpack.c.l.b16 %v514
    %v647 = vunpack.c.l.b16 %v515
    %v648 = vunpack.c.l.b16 %v516
    %v649 = vunpack.c.l.b16 %v517
    %v650 = vunpack.c.l.b16 %v518
    %v651 = vunpack.c.l.b16 %v519
    %v652 = vunpack.c.l.b16 %v520
    %v653 = vunpack.c.l.b16 %v521
    %v654 = vunpack.c.l.b16 %v522
    %v655 = vunpack.c.l.b16 %v523
    %v656 = vunpack.c.l.b16 %v524
    %v657 = vunpack.c.l.b16 %v525
    %v658 = vunpack.c.l.b16 %v526
    %v659 = vunpack.c.l.b16 %v527
    %v660 = vunpack.c.l.b16 %v528
    %v661 = vunpack.c.l.b16 %v529
    %v662 = vpack.c.b16 %v599, %v598
    %v663 = vpack.c.b16 %v601, %v600
    %v664 = vpack.c.b16 %v603, %v602
    %v665 = vpack.c.b16 %v605, %v604
    %v666 = vpack.c.b16 %v607, %v606
    %v667 = vpack.c.b16 %v609, %v608
    %v668 = vpack.c.b16 %v611, %v610
    %v669 = vpack.c.b16 %v613, %v612
    %v670 = vpack.c.b16 %v615, %v614
    %v671 = vpack.c.b16 %v617, %v616
    %v672 = vpack.c.b16 %v619, %v618
    %v673 = vpack.c.b16 %v621, %v620
    %v674 = vpack.c.b16 %v623, %v622
    %v675 = vpack.c.b16 %v625, %v624
    %v676 = vpack.c.b16 %v627, %v626
    %v677 = vpack.c.b16 %v629, %v628
    %v678 = vpack.c.b16 %v631, %v630
    %v679 = vpack.c.b16 %v633, %v632
    %v680 = vpack.c.b16 %v635, %v634
    %v681 = vpack.c.b16 %v637, %v636
    %v682 = vpack.c.b16 %v639, %v638
    %v683 = vpack.c.b16 %v641, %v640
    %v684 = vpack.c.b16 %v643, %v642
    %v685 = vpack.c.b16 %v645, %v644
    %v686 = vpack.c.b16 %v647, %v646
    %v687 = vpack.c.b16 %v649, %v648
    %v688 = vpack.c.b16 %v651, %v650
    %v689 = vpack.c.b16 %v653, %v652
    %v690 = vpack.c.b16 %v655, %v654
    %v691 = vpack.c.b16 %v657, %v656
    %v692 = vpack.c.b16 %v659, %v658
    %v693 = vpack.c.b16 %v661, %v660
    %726 = vmatpush.bf16.msra.mxu0 %v669
    %727 = vmatpush.bf16.msra.mxu0 %v668
    %728 = vmatpush.bf16.msra.mxu0 %v667
    %729 = vmatpush.bf16.msra.mxu0 %v666
    %730 = vmatpush.bf16.msra.mxu0 %v665
    %731 = vmatpush.bf16.msra.mxu0 %v664
    %732 = vmatpush.bf16.msra.mxu0 %v663
    %733 = vmatpush.bf16.msra.mxu0 %v662
    %734 = vmatmul.bf16.gmra.mxu0 %v462
    %v735 = vpop.f32.mrf.mxu0
    %v736 = vadd.f32 %v532, %v735
    %v737 = vpop.f32.mrf.mxu0
    %738 = vdwg.mxu0
    %739 = vmatpush.bf16.msra.mxu0 %v677
    %740 = vmatpush.bf16.msra.mxu0 %v676
    %741 = vmatpush.bf16.msra.mxu0 %v675
    %742 = vmatpush.bf16.msra.mxu0 %v674
    %743 = vmatpush.bf16.msra.mxu0 %v673
    %744 = vmatpush.bf16.msra.mxu0 %v672
    %745 = vmatpush.bf16.msra.mxu0 %v671
    %746 = vmatpush.bf16.msra.mxu0 %v670
    %747 = vmatmul.bf16.gmra.mxu0 %v463
    %v748 = vpop.f32.mrf.mxu0
    %v749 = vadd.f32 %v736, %v748
    %v750 = vpop.f32.mrf.mxu0
    %751 = vdwg.mxu0
    %752 = vmatpush.bf16.msra.mxu0 %v685
    %753 = vmatpush.bf16.msra.mxu0 %v684
    %754 = vmatpush.bf16.msra.mxu0 %v683
    %755 = vmatpush.bf16.msra.mxu0 %v682
    %756 = vmatpush.bf16.msra.mxu0 %v681
    %757 = vmatpush.bf16.msra.mxu0 %v680
    %758 = vmatpush.bf16.msra.mxu0 %v679
    %759 = vmatpush.bf16.msra.mxu0 %v678
    %760 = vmatmul.bf16.gmra.mxu0 %v464
    %v761 = vpop.f32.mrf.mxu0
    %v762 = vadd.f32 %v749, %v761
    %v763 = vpop.f32.mrf.mxu0
    %764 = vdwg.mxu0
    %765 = vmatpush.bf16.msra.mxu0 %v693
    %766 = vmatpush.bf16.msra.mxu0 %v692
    %767 = vmatpush.bf16.msra.mxu0 %v691
    %768 = vmatpush.bf16.msra.mxu0 %v690
    %769 = vmatpush.bf16.msra.mxu0 %v689
    %770 = vmatpush.bf16.msra.mxu0 %v688
    %771 = vmatpush.bf16.msra.mxu0 %v687
    %772 = vmatpush.bf16.msra.mxu0 %v686
    %773 = vmatmul.bf16.gmra.mxu0 %v465
    %v774 = vpop.f32.mrf.mxu0
    %v775 = vadd.f32 %v762, %v774
    %v776 = vpop.f32.mrf.mxu0
    %777 = vdwg.mxu0
    %v778 = vmax.f32 %v775, 0.0
    %v779 = vpack.c.bf16 %v778, %v778
    %v780 = vld [vmem:[#allocation7] sm:$0xff]
    %v781 = vld [vmem:[#allocation7 + $0x8] sm:$0xff]
    %v782 = vld [vmem:[#allocation7 + $0x10] sm:$0xff]
    %v783 = vld [vmem:[#allocation7 + $0x18] sm:$0xff]
    %v784 = vld [vmem:[#allocation7 + $0x20] sm:$0xff]
    %v785 = vld [vmem:[#allocation7 + $0x28] sm:$0xff]
    %v786 = vld [vmem:[#allocation7 + $0x30] sm:$0xff]
    %v787 = vld [vmem:[#allocation7 + $0x38] sm:$0xff]
    %v788 = vld [vmem:[#allocation7 + $0x40] sm:$0xff]
    %v789 = vld [vmem:[#allocation7 + $0x48] sm:$0xff]
    %v790 = vld [vmem:[#allocation7 + $0x50] sm:$0xff]
    %v791 = vld [vmem:[#allocation7 + $0x58] sm:$0xff]
    %v792 = vld [vmem:[#allocation7 + $0x60] sm:$0xff]
    %v793 = vld [vmem:[#allocation7 + $0x68] sm:$0xff]
    %v794 = vld [vmem:[#allocation7 + $0x70] sm:$0xff]
    %v795 = vld [vmem:[#allocation7 + $0x78] sm:$0xff]
    %v796 = vld [vmem:[%s6] sm:$0x3]
    %v798 = vperm.slane %v796, 0
    %v799 = vperm.slane %v796, 1
    %v818 = vunpack.c.l.b16 %v780
    %v819 = vunpack.c.h.b16 %v780
    %v820 = vunpack.c.l.b16 %v781
    %v821 = vunpack.c.h.b16 %v781
    %v822 = vunpack.c.l.b16 %v782
    %v823 = vunpack.c.h.b16 %v782
    %v824 = vunpack.c.l.b16 %v783
    %v825 = vunpack.c.h.b16 %v783
    %v826 = vunpack.c.l.b16 %v784
    %v827 = vunpack.c.h.b16 %v784
    %v828 = vunpack.c.l.b16 %v785
    %v829 = vunpack.c.h.b16 %v785
    %v830 = vunpack.c.l.b16 %v786
    %v831 = vunpack.c.h.b16 %v786
    %v832 = vunpack.c.l.b16 %v787
    %v833 = vunpack.c.h.b16 %v787
    %v834 = vunpack.c.l.b16 %v788
    %v835 = vunpack.c.h.b16 %v788
    %v836 = vunpack.c.l.b16 %v789
    %v837 = vunpack.c.h.b16 %v789
    %v838 = vunpack.c.l.b16 %v790
    %v839 = vunpack.c.h.b16 %v790
    %v840 = vunpack.c.l.b16 %v791
    %v841 = vunpack.c.h.b16 %v791
    %v842 = vunpack.c.l.b16 %v792
    %v843 = vunpack.c.h.b16 %v792
    %v844 = vunpack.c.l.b16 %v793
    %v845 = vunpack.c.h.b16 %v793
    %v846 = vunpack.c.l.b16 %v794
    %v847 = vunpack.c.h.b16 %v794
    %v848 = vunpack.c.l.b16 %v795
    %v849 = vunpack.c.h.b16 %v795
    %v850 = vpack.c.b16 %v820, %v818
    %v851 = vpack.c.b16 %v821, %v819
    %v852 = vpack.c.b16 %v824, %v822
    %v853 = vpack.c.b16 %v825, %v823
    %v854 = vpack.c.b16 %v828, %v826
    %v855 = vpack.c.b16 %v829, %v827
    %v856 = vpack.c.b16 %v832, %v830
    %v857 = vpack.c.b16 %v833, %v831
    %v858 = vpack.c.b16 %v836, %v834
    %v859 = vpack.c.b16 %v837, %v835
    %v860 = vpack.c.b16 %v840, %v838
    %v861 = vpack.c.b16 %v841, %v839
    %v862 = vpack.c.b16 %v844, %v842
    %v863 = vpack.c.b16 %v845, %v843
    %v864 = vpack.c.b16 %v848, %v846
    %v865 = vpack.c.b16 %v849, %v847
    %882 = vmatpush.bf16.msra.mxu0 %v864
    %883 = vmatpush.bf16.msra.mxu0 %v862
    %884 = vmatpush.bf16.msra.mxu0 %v860
    %885 = vmatpush.bf16.msra.mxu0 %v858
    %886 = vmatpush.bf16.msra.mxu0 %v856
    %887 = vmatpush.bf16.msra.mxu0 %v854
    %888 = vmatpush.bf16.msra.mxu0 %v852
    %889 = vmatpush.bf16.msra.mxu0 %v850
    %890 = vmatmul.bf16.gmra.mxu0 %v779
    %v891 = vpop.f32.mrf.mxu0
    %v892 = vadd.f32 %v798, %v891
    %v893 = vpop.f32.mrf.mxu0
    %894 = vdwg.mxu0
    %895 = vmatpush.bf16.msra.mxu0 %v865
    %896 = vmatpush.bf16.msra.mxu0 %v863
    %897 = vmatpush.bf16.msra.mxu0 %v861
    %898 = vmatpush.bf16.msra.mxu0 %v859
    %899 = vmatpush.bf16.msra.mxu0 %v857
    %900 = vmatpush.bf16.msra.mxu0 %v855
    %901 = vmatpush.bf16.msra.mxu0 %v853
    %902 = vmatpush.bf16.msra.mxu0 %v851
    %903 = vmatmul.bf16.gmra.mxu0 %v779
    %v904 = vpop.f32.mrf.mxu0
    %v905 = vadd.f32 %v799, %v904
    %v906 = vpop.f32.mrf.mxu0
    %907 = vdwg.mxu0
    %v908 = vmax.f32 %v892, 0.0
    %v909 = vmax.f32 %v905, 0.0
    %v910 = vpack.c.bf16 %v909, %v908
    %v912 = vrot.slane %v910, 3
    %vm913 = vcmask 1040384
    %v916 = vsel %vm913, %v910, %v912
    %918 = vst [vmem:[#allocation9] sm:$0x3] %v916
    // Predicated region
    $region42: #{tpu_custom_call.1} parent=1 // pred_check
      _
    $region43: #{tpu_custom_call.1} parent=1 // pred_check_branch
      %920 = sbr.rel (0) target = $region45
    $region44: #{tpu_custom_call.1} parent=1 // pred_region
      %922 = vsyncadd [#allocation4], 0
      %s924 = sshll.u32 [#allocation8], 4
      %s925 = int_to_ptr.vmem [resolvable:$true] %s924
      %s926 = sshll.u32 %s7, 4
      %s927 = int_to_ptr.hbm [resolvable:$true] %s926
      %929 = dma.vmem_to_hbm [thread:$0]  %s925, 128, %s927, [#allocation4]
    $region45: #{tpu_custom_call.1} parent=1 // pred_fallthru
      _
    // Predicated region
    $region46: #{tpu_custom_call.1} parent=1 // pred_check
      _
    $region47: #{tpu_custom_call.1} parent=1 // pred_check_branch
      %931 = sbr.rel (0) target = $region49
    $region48: #{tpu_custom_call.1} parent=1 // pred_region
      %933 = vsyncadd [#allocation10], 0
      %s935 = sshll.u32 [#allocation9], 4
      %s936 = int_to_ptr.vmem [resolvable:$true] %s935
      %s937 = sshll.u32 %s8, 4
      %s938 = int_to_ptr.hbm [resolvable:$true] %s937
      %940 = dma.vmem_to_hbm [thread:$0]  %s936, 32, %s938, [#allocation10]
    $region49: #{tpu_custom_call.1} parent=1 // pred_fallthru
      _
    // Predicated region
    $region50: #{tpu_custom_call.1} parent=1 // pred_check
      _
    $region51: #{tpu_custom_call.1} parent=1 // pred_check_branch
      %942 = sbr.rel (0) target = $region53
    $region52: #{tpu_custom_call.1} parent=1 // pred_region
      %944 = dma.done [#allocation4], 128
    $region53: #{tpu_custom_call.1} parent=1 // pred_fallthru
      _
    // Predicated region
    $region54: #{tpu_custom_call.1} parent=1 // pred_check
      _
    $region55: #{tpu_custom_call.1} parent=1 // pred_check_branch
      %946 = sbr.rel (0) target = $region57
    $region56: #{tpu_custom_call.1} parent=1 // pred_region
      %948 = dma.done [#allocation10], 32
    $region57: #{tpu_custom_call.1} parent=1 // pred_fallthru
      _
    %949 = vsyncpa [#allocation3], 1
    %950 = vsyncpa [#allocation6], 1
    %951 = vsyncpa [#allocation4], 1
    %952 = vsyncpa [#allocation10], 1

</llo_original>
